<compile_context>
chip_gen: v7x
topology: tpu7x:2x2x1
jax: 0.10.0
libtpu: 0.0.40
codegen_flags: <defaults>
</compile_context>

<pallas_src>
import math
from functools import partial

import jax
import jax.numpy as jnp
from jax.experimental import pallas as pl
from jax.experimental.pallas import tpu as pltpu


# ----------------------------- tiling helper ------------------------------

def _tile(dim, target):
    """Largest tile <= target that evenly divides dim (falls back to dim)."""
    if dim <= target:
        return dim
    if dim % target == 0:
        return target
    return dim


# ----------------------------- Pallas kernels ------------------------------

def _linear_kernel(x_ref, w_ref, b_ref, o_ref, acc_ref, *, relu):
    """Tiled matmul with K-reduction accumulator: (tm,tk)@(tk,tn) += acc."""
    @pl.when(pl.program_id(2) == 0)
    def _():
        acc_ref[...] = jnp.zeros_like(acc_ref)

    acc_ref[...] += jnp.dot(x_ref[...], w_ref[...],
                            preferred_element_type=jnp.float32)

    @pl.when(pl.program_id(2) == pl.num_programs(2) - 1)
    def _():
        y = acc_ref[...] + b_ref[...]
        if relu:
            y = jnp.maximum(y, 0.0)
        o_ref[...] = y


def _ffn_kernel(x_ref, w1_ref, b1_ref, w2_ref, b2_ref, o_ref, acc_ref):
    """Fused linear+ReLU+linear with a reduction over dff tiles."""
    @pl.when(pl.program_id(1) == 0)
    def _():
        acc_ref[...] = jnp.zeros_like(acc_ref)

    h = jnp.dot(x_ref[...], w1_ref[...], preferred_element_type=jnp.float32)
    h = jnp.maximum(h + b1_ref[...], 0.0)
    acc_ref[...] += jnp.dot(h, w2_ref[...], preferred_element_type=jnp.float32)

    @pl.when(pl.program_id(1) == pl.num_programs(1) - 1)
    def _():
        o_ref[...] = acc_ref[...] + b2_ref[...]


def _add_layernorm_kernel(x_ref, r_ref, g_ref, b_ref, o_ref):
    """Fused residual add + LayerNorm (nn.LayerNorm default eps)."""
    x = x_ref[...] + r_ref[...]
    mean = jnp.mean(x, axis=-1, keepdims=True)
    var = jnp.mean(jnp.square(x - mean), axis=-1, keepdims=True)
    inv = jax.lax.rsqrt(var + 1e-5)
    o_ref[...] = (x - mean) * inv * g_ref[...] + b_ref[...]


def _mha_kernel(q_ref, k_ref, v_ref, bias_ref, o_ref, *, num_heads):
    """All heads of one batch per block; lane-dense (tq, D) blocks and a
    per-batch additive mask shared across heads."""
    q = q_ref[0]            # (tq, D)
    k = k_ref[0]            # (Sk, D)
    v = v_ref[0]            # (Sk, D)
    bias = bias_ref[0]      # (tq, Sk) additive (0 or -1e9)
    D = q.shape[-1]
    dk = D // num_heads
    scale = 1.0 / math.sqrt(dk)

    outs = []
    for h in range(num_heads):                     # static unroll over heads
        qh = q[:, h * dk:(h + 1) * dk]
        kh = k[:, h * dk:(h + 1) * dk]
        vh = v[:, h * dk:(h + 1) * dk]
        # contract on dk without materialising k.T
        s = jax.lax.dot_general(qh, kh, (((1,), (1,)), ((), ())),
                                preferred_element_type=jnp.float32)
        s = s * scale + bias
        m = jnp.max(s, axis=-1, keepdims=True)
        p = jnp.exp(s - m)
        denom = jnp.sum(p, axis=-1, keepdims=True)
        p = p * pl.reciprocal(denom, approx=True)      # EUP, near-free
        outs.append(jnp.dot(p, vh, preferred_element_type=jnp.float32))

    # single lane-dense (tq, D) store
    o_ref[0] = jnp.concatenate(outs, axis=-1)
    # TODO(synk): for Sk in the thousands switch to an online-softmax (flash)
    # form with a kv-tile grid axis and m/l/acc scratch.


# ----------------------------- Pallas wrappers ------------------------------

def linear(x2d, w, b, relu=False, *, tm=256, tn=256, tk=256):
    """x2d: (M, K) @ w: (K, N) + b: (N,) -> (M, N), all f32, tiled."""
    M, K = x2d.shape
    N = w.shape[1]
    tm, tn, tk = _tile(M, tm), _tile(N, tn), _tile(K, tk)
    return pl.pallas_call(
        partial(_linear_kernel, relu=relu),
        out_shape=jax.ShapeDtypeStruct((M, N), jnp.float32),
        grid=(M // tm, N // tn, K // tk),
        in_specs=[pl.BlockSpec((tm, tk), lambda i, j, k: (i, k)),
                  pl.BlockSpec((tk, tn), lambda i, j, k: (k, j)),
                  pl.BlockSpec((1, tn), lambda i, j, k: (0, j))],
        out_specs=pl.BlockSpec((tm, tn), lambda i, j, k: (i, j)),
        scratch_shapes=[pltpu.VMEM((tm, tn), jnp.float32)],
        compiler_params=pltpu.CompilerParams(
            dimension_semantics=("parallel", "parallel", "arbitrary")),
    )(x2d, w, b.reshape(1, N))


def feed_forward(x, p, *, tm=256, tf=512):
    """Fused FFN: relu(x@w1+b1)@w2+b2 with a dff-reduction grid axis."""
    B, S, D = x.shape
    dff = p["w1"].shape[1]
    M = B * S
    tm, tf = _tile(M, tm), _tile(dff, tf)
    out = pl.pallas_call(
        _ffn_kernel,
        out_shape=jax.ShapeDtypeStruct((M, D), jnp.float32),
        grid=(M // tm, dff // tf),
        in_specs=[pl.BlockSpec((tm, D), lambda i, j: (i, 0)),
                  pl.BlockSpec((D, tf), lambda i, j: (0, j)),
                  pl.BlockSpec((1, tf), lambda i, j: (0, j)),
                  pl.BlockSpec((tf, D), lambda i, j: (j, 0)),
                  pl.BlockSpec((1, D), lambda i, j: (0, 0))],
        out_specs=pl.BlockSpec((tm, D), lambda i, j: (i, 0)),
        scratch_shapes=[pltpu.VMEM((tm, D), jnp.float32)],
        compiler_params=pltpu.CompilerParams(
            dimension_semantics=("parallel", "arbitrary")),
    )(x.reshape(M, D), p["w1"], p["b1"].reshape(1, dff),
      p["w2"], p["b2"].reshape(1, D))
    return out.reshape(B, S, D)


def add_layernorm(x, r, gamma, beta, *, tm=512):
    """LayerNorm(x + r), fused."""
    B, S, D = x.shape
    M = B * S
    tm = _tile(M, tm)
    out = pl.pallas_call(
        _add_layernorm_kernel,
        out_shape=jax.ShapeDtypeStruct((M, D), jnp.float32),
        grid=(M // tm,),
        in_specs=[pl.BlockSpec((tm, D), lambda i: (i, 0)),
                  pl.BlockSpec((tm, D), lambda i: (i, 0)),
                  pl.BlockSpec((1, D), lambda i: (0, 0)),
                  pl.BlockSpec((1, D), lambda i: (0, 0))],
        out_specs=pl.BlockSpec((tm, D), lambda i: (i, 0)),
        compiler_params=pltpu.CompilerParams(
            dimension_semantics=("parallel",)),
    )(x.reshape(M, D), r.reshape(M, D),
      gamma.reshape(1, D), beta.reshape(1, D))
    return out.reshape(B, S, D)


def attention(q, k, v, bias, num_heads, *, tq=256):
    """q: (B, Sq, D), k/v: (B, Sk, D), bias: (B, Sq, Sk) additive."""
    B, Sq, D = q.shape
    Sk = k.shape[1]
    tq = _tile(Sq, tq)
    return pl.pallas_call(
        partial(_mha_kernel, num_heads=num_heads),
        out_shape=jax.ShapeDtypeStruct((B, Sq, D), jnp.float32),
        grid=(B, Sq // tq),
        in_specs=[pl.BlockSpec((1, tq, D), lambda b, i: (b, i, 0)),
                  pl.BlockSpec((1, Sk, D), lambda b, i: (b, 0, 0)),
                  pl.BlockSpec((1, Sk, D), lambda b, i: (b, 0, 0)),
                  pl.BlockSpec((1, tq, Sk), lambda b, i: (b, i, 0))],
        out_specs=pl.BlockSpec((1, tq, D), lambda b, i: (b, i, 0)),
        compiler_params=pltpu.CompilerParams(
            dimension_semantics=("parallel", "parallel")),
    )(q, k, v, bias)


# ----------------------------- model glue ------------------------------

def multi_head_attention(x_q, x_kv, mask_bool, p, num_heads):
    """x_q: (B, Sq, D), x_kv: (B, Sk, D); mask broadcastable to
    (B, 1, Sq, Sk) with True == masked out."""
    B, Sq, D = x_q.shape
    Sk = x_kv.shape[1]

    if x_q is x_kv:
        # self-attention: single fused QKV projection over the shared input
        qkv = linear(x_q.reshape(B * Sq, D), p["wqkv"], p["bqkv"])
        qkv = qkv.reshape(B, Sq, 3 * D)
        q, k, v = qkv[..., :D], qkv[..., D:2 * D], qkv[..., 2 * D:]
    else:
        # cross-attention: Q from the query stream, fused KV from the kv stream
        q = linear(x_q.reshape(B * Sq, D),
                   p["wqkv"][:, :D], p["bqkv"][:D]).reshape(B, Sq, D)
        kv = linear(x_kv.reshape(B * Sk, D),
                    p["wqkv"][:, D:], p["bqkv"][D:]).reshape(B, Sk, 2 * D)
        k, v = kv[..., :D], kv[..., D:]

    # per-batch additive mask, shared across heads (no H-fold replication)
    mask_b = jnp.broadcast_to(mask_bool, (B, 1, Sq, Sk))[:, 0]
    bias = jnp.where(mask_b, jnp.float32(-1e9), jnp.float32(0.0))

    o = attention(q, k, v, bias, num_heads)                  # (B, Sq, D)
    o = linear(o.reshape(B * Sq, D), p["wo"], p["bo"]).reshape(B, Sq, D)
    return o


def encoder_layer(x, mask, p, num_heads):
    a = multi_head_attention(x, x, mask, p["mha"], num_heads)
    x = add_layernorm(x, a, p["ln1_g"], p["ln1_b"])
    f = feed_forward(x, p["ffn"])
    x = add_layernorm(x, f, p["ln2_g"], p["ln2_b"])
    return x


def decoder_layer(x, enc_out, dec_mask, enc_mask, p, num_heads):
    a = multi_head_attention(x, x, dec_mask, p["self_mha"], num_heads)
    x = add_layernorm(x, a, p["ln1_g"], p["ln1_b"])
    a = multi_head_attention(x, enc_out, enc_mask, p["cross_mha"], num_heads)
    x = add_layernorm(x, a, p["ln2_g"], p["ln2_b"])
    f = feed_forward(x, p["ffn"])
    x = add_layernorm(x, f, p["ln3_g"], p["ln3_b"])
    return x


def create_padding_mask(tokens, pad_idx):
    # (B, 1, 1, S), True == pad token (masked out)
    return (tokens == pad_idx)[:, None, None, :]


def create_attention_mask(seq_len):
    # upper-triangular (future) positions masked, (S, S) bool
    return jnp.triu(jnp.ones((seq_len, seq_len), dtype=bool), k=1)


def sinusoidal_pe(max_len, d_model):
    pos = jnp.arange(max_len, dtype=jnp.float32)[:, None]
    div = jnp.exp(jnp.arange(0, d_model, 2, dtype=jnp.float32)
                  * (-math.log(10000.0) / d_model))
    pe = jnp.zeros((max_len, d_model), dtype=jnp.float32)
    pe = pe.at[:, 0::2].set(jnp.sin(pos * div))
    pe = pe.at[:, 1::2].set(jnp.cos(pos * div))
    return pe


def transformer_forward(params, enc_tokens, dec_tokens, *, num_heads, d_model,
                        pad_idx):
    enc_mask = create_padding_mask(enc_tokens, pad_idx)           # (B,1,1,Se)
    Sd = dec_tokens.shape[1]
    dec_mask = (create_attention_mask(Sd)[None, None, :, :]
                | create_padding_mask(dec_tokens, pad_idx))       # (B,1,Sd,Sd)

    scale = math.sqrt(d_model)
    enc_x = params["embed"][enc_tokens] * scale
    dec_x = params["embed"][dec_tokens] * scale
    enc_x = enc_x + params["pe"][None, :enc_tokens.shape[1], :]
    dec_x = dec_x + params["pe"][None, :Sd, :]
    # TODO(synk): dropout after positional encoding is identity at eval time.

    for lp in params["enc_layers"]:
        enc_x = encoder_layer(enc_x, enc_mask, lp, num_heads)
    for lp in params["dec_layers"]:
        dec_x = decoder_layer(dec_x, enc_x, dec_mask, enc_mask, lp, num_heads)

    B, Sd, D = dec_x.shape
    # vocab projection: N tiled at 512, K at 256 to keep per-block VMEM bounded
    logits = linear(dec_x.reshape(B * Sd, D), params["fc_w"], params["fc_b"],
                    tn=512, tk=256)
    return logits.reshape(B, Sd, -1)


# ----------------------------- parameter init ------------------------------

def _dense(key, fan_in, fan_out):
    w = jax.random.normal(key, (fan_in, fan_out), dtype=jnp.float32) * 0.02
    b = jnp.zeros((fan_out,), dtype=jnp.float32)
    return w, b


def _mha_params(key, d_model):
    k1, k2 = jax.random.split(key)
    wqkv, bqkv = _dense(k1, d_model, 3 * d_model)   # fused [Wq | Wk | Wv]
    wo, bo = _dense(k2, d_model, d_model)
    return dict(wqkv=wqkv, bqkv=bqkv, wo=wo, bo=bo)


def _ffn_params(key, d_model, dff):
    k1, k2 = jax.random.split(key)
    w1, b1 = _dense(k1, d_model, dff)
    w2, b2 = _dense(k2, dff, d_model)
    return dict(w1=w1, b1=b1, w2=w2, b2=b2)


def init_params(key, *, d_model, dff, num_layers, max_len, vocab_size,
                pad_idx):
    keys = jax.random.split(key, 2 + 2 * num_layers)
    embed = jax.random.normal(keys[0], (vocab_size, d_model),
                              dtype=jnp.float32) * 0.02
    embed = embed.at[pad_idx].set(0.0)        # padding_idx row is zero
    fc_w, fc_b = _dense(keys[1], d_model, vocab_size)

    def ln(d):
        return jnp.ones((d,), jnp.float32), jnp.zeros((d,), jnp.float32)

    enc_layers = []
    for i in range(num_layers):
        k_mha, k_ffn = jax.random.split(keys[2 + i])
        g1, b1 = ln(d_model)
        g2, b2 = ln(d_model)
        enc_layers.append(dict(mha=_mha_params(k_mha, d_model),
                               ffn=_ffn_params(k_ffn, d_model, dff),
                               ln1_g=g1, ln1_b=b1, ln2_g=g2, ln2_b=b2))

    dec_layers = []
    for i in range(num_layers):
        k_s, k_c, k_f = jax.random.split(keys[2 + num_layers + i], 3)
        g1, b1 = ln(d_model)
        g2, b2 = ln(d_model)
        g3, b3 = ln(d_model)
        dec_layers.append(dict(self_mha=_mha_params(k_s, d_model),
                               cross_mha=_mha_params(k_c, d_model),
                               ffn=_ffn_params(k_f, d_model, dff),
                               ln1_g=g1, ln1_b=b1, ln2_g=g2, ln2_b=b2,
                               ln3_g=g3, ln3_b=b3))

    return dict(embed=embed, pe=sinusoidal_pe(max_len, d_model),
                enc_layers=enc_layers, dec_layers=dec_layers,
                fc_w=fc_w, fc_b=fc_b)


# ----------------------------- main ------------------------------

if __name__ == "__main__":
    D_MODEL = 32
    DFF = 64
    NUM_HEADS = 4
    NUM_LAYERS = 2
    MAX_LEN = 16
    VOCAB = 64
    PAD_IDX = 0
    B, S = 2, 8

    root = jax.random.PRNGKey(0)
    k_param, k_enc, k_dec = jax.random.split(root, 3)

    params = init_params(k_param, d_model=D_MODEL, dff=DFF,
                         num_layers=NUM_LAYERS, max_len=MAX_LEN,
                         vocab_size=VOCAB, pad_idx=PAD_IDX)

    enc_tokens = jax.random.randint(k_enc, (B, S), 1, VOCAB, dtype=jnp.int32)
    dec_tokens = jax.random.randint(k_dec, (B, S), 1, VOCAB, dtype=jnp.int32)
    # add a couple of pad tokens so the padding mask is exercised
    enc_tokens = enc_tokens.at[:, -1].set(PAD_IDX)
    dec_tokens = dec_tokens.at[:, -1].set(PAD_IDX)

    logits = transformer_forward(params, enc_tokens, dec_tokens,
                                 num_heads=NUM_HEADS, d_model=D_MODEL,
                                 pad_idx=PAD_IDX)
    jax.block_until_ready(logits)

    assert logits.shape == (B, S, VOCAB), logits.shape
    assert bool(jnp.all(jnp.isfinite(logits)))
    print("KERNEL_OK")
</pallas_src>

<mosaic_0001>
module attributes {stable_mosaic.version = 11 : i64} {
  func.func @_linear_kernel(%arg0: i32, %arg1: i32, %arg2: i32, %arg3: memref<16x32xf32, #tpu.memory_space<vmem>>, %arg4: memref<32x96xf32, #tpu.memory_space<vmem>>, %arg5: memref<1x96xf32, #tpu.memory_space<vmem>>, %arg6: memref<16x96xf32, #tpu.memory_space<vmem>>, %arg7: memref<16x96xf32, #tpu.memory_space<vmem>>) attributes {dimension_semantics = [#tpu.dimension_semantics<parallel>, #tpu.dimension_semantics<parallel>, #tpu.dimension_semantics<arbitrary>], iteration_bounds = array<i64: 1, 1, 1>, scalar_prefetch = 0 : i64, scratch_operands = 1 : i64, tpu.core_type = #tpu.core_type<tc>, window_params = [{transform_indices = @transform_0, window_bounds = array<i64: 16, 32>}, {transform_indices = @transform_1, window_bounds = array<i64: 32, 96>}, {transform_indices = @transform_2, window_bounds = array<i64: 1, 96>}, {transform_indices = @transform_3, window_bounds = array<i64: 16, 96>}]} {
    %c0_i32 = arith.constant 0 : i32
    %0 = arith.cmpi eq, %arg2, %c0_i32 : i32
    %1 = arith.extui %0 : i1 to i32
    %c0_i32_0 = arith.constant 0 : i32
    %2 = arith.cmpi ne, %1, %c0_i32_0 : i32
    scf.if %2 {
      %cst_10 = arith.constant 0.000000e+00 : f32
      %12 = vector.broadcast %cst_10 : f32 to vector<16x96xf32>
      %c0_11 = arith.constant 0 : index
      %c0_12 = arith.constant 0 : index
      %13 = vector.load %arg7[%c0_11, %c0_12] : memref<16x96xf32, #tpu.memory_space<vmem>>, vector<16x96xf32>
      tpu.vector_store %arg7[%c0_11, %c0_12], %12 {strides = array<i32>} : memref<16x96xf32, #tpu.memory_space<vmem>>, vector<16x96xf32>,
    } else {
    }
    %c0 = arith.constant 0 : index
    %c0_1 = arith.constant 0 : index
    %3 = vector.load %arg7[%c0, %c0_1] : memref<16x96xf32, #tpu.memory_space<vmem>>, vector<16x96xf32>
    %c0_2 = arith.constant 0 : index
    %c0_3 = arith.constant 0 : index
    %4 = vector.load %arg3[%c0_2, %c0_3] : memref<16x32xf32, #tpu.memory_space<vmem>>, vector<16x32xf32>
    %c0_4 = arith.constant 0 : index
    %c0_5 = arith.constant 0 : index
    %5 = vector.load %arg4[%c0_4, %c0_5] : memref<32x96xf32, #tpu.memory_space<vmem>>, vector<32x96xf32>
    %cst = arith.constant dense<0.000000e+00> : vector<16x96xf32>
    %6 = tpu.matmul %4, %5, %cst {dimension_numbers = #tpu.dot_dimension_numbers<[1], [0], [0], [1], [0, 0, 1, 1], [], []>} : vector<16x32xf32>, vector<32x96xf32>, vector<16x96xf32> -> vector<16x96xf32>
    %7 = arith.addf %3, %6 : vector<16x96xf32>
    %c0_6 = arith.constant 0 : index
    %c0_7 = arith.constant 0 : index
    %8 = vector.load %arg7[%c0_6, %c0_7] : memref<16x96xf32, #tpu.memory_space<vmem>>, vector<16x96xf32>
    tpu.vector_store %arg7[%c0_6, %c0_7], %7 {strides = array<i32>} : memref<16x96xf32, #tpu.memory_space<vmem>>, vector<16x96xf32>,
    %c0_i32_8 = arith.constant 0 : i32
    %9 = arith.cmpi eq, %arg2, %c0_i32_8 : i32
    %10 = arith.extui %9 : i1 to i32
    %c0_i32_9 = arith.constant 0 : i32
    %11 = arith.cmpi ne, %10, %c0_i32_9 : i32
    scf.if %11 {
      %c0_10 = arith.constant 0 : index
      %c0_11 = arith.constant 0 : index
      %12 = vector.load %arg7[%c0_10, %c0_11] : memref<16x96xf32, #tpu.memory_space<vmem>>, vector<16x96xf32>
      %c0_12 = arith.constant 0 : index
      %c0_13 = arith.constant 0 : index
      %13 = vector.load %arg5[%c0_12, %c0_13] : memref<1x96xf32, #tpu.memory_space<vmem>>, vector<1x96xf32>
      %14 = vector.broadcast %13 : vector<1x96xf32> to vector<16x96xf32>
      %15 = arith.addf %12, %14 : vector<16x96xf32>
      %c0_14 = arith.constant 0 : index
      %c0_15 = arith.constant 0 : index
      %16 = vector.load %arg6[%c0_14, %c0_15] : memref<16x96xf32, #tpu.memory_space<vmem>>, vector<16x96xf32>
      tpu.vector_store %arg6[%c0_14, %c0_15], %15 {strides = array<i32>} : memref<16x96xf32, #tpu.memory_space<vmem>>, vector<16x96xf32>,
    } else {
    }
    return
  }
  func.func @transform_0(%arg0: i32, %arg1: i32, %arg2: i32) -> (i32, i32) {
    %c0_i32 = arith.constant 0 : i32
    return %arg0, %arg2 : i32, i32
  }
  func.func @transform_1(%arg0: i32, %arg1: i32, %arg2: i32) -> (i32, i32) {
    %c0_i32 = arith.constant 0 : i32
    return %arg2, %arg1 : i32, i32
  }
  func.func @transform_2(%arg0: i32, %arg1: i32, %arg2: i32) -> (i32, i32) {
    %c0_i32 = arith.constant 0 : i32
    %c0_i32_0 = arith.constant 0 : i32
    return %c0_i32, %arg1 : i32, i32
  }
  func.func @transform_3(%arg0: i32, %arg1: i32, %arg2: i32) -> (i32, i32) {
    %c0_i32 = arith.constant 0 : i32
    return %arg0, %arg1 : i32, i32
  }
}

</mosaic_0001>

<llo_original>
// kernel: tpu_custom_call.1
$region0: #{tpu_custom_call.1}
  #allocation0 [shape = 'u32[]', space=smem, size = 0x4, offset = 0x4, fixed_abs, tag = 'smem constant byte address 0x4 - core index']
  #allocation1 [shape = 'u32[144,128]{1,0:T(1,128)}', space=vmem, size = 0x12000, scoped, tag = 'internal scratch']
  #allocation2 [shape = 'f32[16,96]{1,0:T(8,128)}', space=vmem, size = 0x2000, scoped, tag = 'scratch operand']
  %s0 = inlined_call_operand.hbm [shape: f32[16,32], index: 0, kind: input, shape index: {}]
  %s1 = inlined_call_operand.hbm [shape: f32[32,96], index: 1, kind: input, shape index: {}]
  %s2 = inlined_call_operand.vmem [shape: f32[1,96], index: 2, kind: input, shape index: {}]
  %s3 = inlined_call_operand.hbm [shape: f32[16,96], index: 3, kind: output, shape index: {}]
  %s4 = sld [smem:[#allocation0]]
  $region38: #{tpu_custom_call.1} parent=0
    _
  %s6 = ssub.s32 1, %s4
  %s7 = scalar_select 0, %s6, %s4
  $region1: #{tpu_custom_call.1} parent=0
    #allocation3 [shape = 'u8[8192]{0}', space=vmem, size = 0x2000, scoped, tag = 'input window, operand 0, single buffered']
    #allocation4 [shape = 's32[1]{0}', space=sflag, size = 0x4, scoped, tag = 'scoped memory for tpu_custom_call.1']
    #allocation5 [shape = 's32[1]{0}', space=sflag, size = 0x4, scoped, tag = 'scoped memory for tpu_custom_call.1']
    #allocation6 [shape = 'u8[16384]{0}', space=vmem, size = 0x4000, scoped, tag = 'input window, operand 1, single buffered']
    #allocation7 [shape = 's32[1]{0}', space=sflag, size = 0x4, scoped, tag = 'scoped memory for tpu_custom_call.1']
    #allocation8 [shape = 'u8[8192]{0}', space=vmem, size = 0x2000, scoped, tag = 'output window, operand 0, single buffered']
    %8 = vsyncpa [#allocation4], 0
    %9 = vsyncpa [#allocation7], 0
    %10 = vsyncpa [#allocation5], 0
    // Predicated region
    $region2: #{tpu_custom_call.1} parent=1 // pred_check
      _
    $region3: #{tpu_custom_call.1} parent=1 // pred_check_branch
      %12 = sbr.rel (0) target = $region5
    $region4: #{tpu_custom_call.1} parent=1 // pred_region
      %s14 = ssub.s32 256, 256
      %15 = vsyncadd [#allocation4], %s14
      %s16 = sshll.u32 [#allocation3], 4
      %s17 = int_to_ptr.vmem [resolvable:$true] %s16
      %22 = dma.hbm_to_vmem [thread:$0]  %s0, 256, %s17, [#allocation4], 128, 128, 8
    $region5: #{tpu_custom_call.1} parent=1 // pred_fallthru
      _
    // Predicated region
    $region6: #{tpu_custom_call.1} parent=1 // pred_check
      _
    $region7: #{tpu_custom_call.1} parent=1 // pred_check_branch
      %24 = sbr.rel (0) target = $region9
    $region8: #{tpu_custom_call.1} parent=1 // pred_region
      %s26 = ssub.s32 512, 512
      %27 = vsyncadd [#allocation7], %s26
      %s28 = sshll.u32 [#allocation6], 4
      %s29 = int_to_ptr.vmem [resolvable:$true] %s28
      %34 = dma.hbm_to_vmem [thread:$0]  %s1, 512, %s29, [#allocation7], 128, 128, 8
    $region9: #{tpu_custom_call.1} parent=1 // pred_fallthru
      _
    // Predicated region
    $region10: #{tpu_custom_call.1} parent=1 // pred_check
      _
    $region11: #{tpu_custom_call.1} parent=1 // pred_check_branch
      %36 = sbr.rel (0) target = $region13
    $region12: #{tpu_custom_call.1} parent=1 // pred_region
      _
    $region13: #{tpu_custom_call.1} parent=1 // pred_fallthru
      _
    // Predicated region
    $region14: #{tpu_custom_call.1} parent=1 // pred_check
      _
    $region15: #{tpu_custom_call.1} parent=1 // pred_check_branch
      %38 = sbr.rel (0) target = $region17
    $region16: #{tpu_custom_call.1} parent=1 // pred_region
      %39 = dma.done [#allocation4], 256
    $region17: #{tpu_custom_call.1} parent=1 // pred_fallthru
      _
    // Predicated region
    $region18: #{tpu_custom_call.1} parent=1 // pred_check
      _
    $region19: #{tpu_custom_call.1} parent=1 // pred_check_branch
      %41 = sbr.rel (0) target = $region21
    $region20: #{tpu_custom_call.1} parent=1 // pred_region
      %42 = dma.done [#allocation7], 512
    $region21: #{tpu_custom_call.1} parent=1 // pred_fallthru
      _
    %p43 = scmp.eq.s32.totalorder 0, 0
    // Predicated region
    $region22: #{tpu_custom_call.1} parent=1 // pred_check
      %p44 = pneg %p43
    $region23: #{tpu_custom_call.1} parent=1 // pred_check_branch
      %46 = sbr.rel (%p44) target = $region25
    $region24: #{tpu_custom_call.1} parent=1 // pred_region
      %vm47 = vcmask 785408
      %48 = vst.msk [vmem:[#allocation2] sm:$0xff] %vm47, 0.0
      %49 = vst.msk [vmem:[#allocation2 + $0x8] sm:$0xff] %vm47, 0.0
    $region25: #{tpu_custom_call.1} parent=1 // pred_fallthru
      _
    %v50 = vld [vmem:[#allocation2] sm:$0xff]
    %v51 = vld [vmem:[#allocation2 + $0x8] sm:$0xff]
    %v52 = vld [vmem:[#allocation3] sm:$0xff]
    %v53 = vld [vmem:[#allocation3 + $0x8] sm:$0xff]
    %v54 = vld [vmem:[#allocation6] sm:$0xff]
    %v55 = vld [vmem:[#allocation6 + $0x8] sm:$0xff]
    %v56 = vld [vmem:[#allocation6 + $0x10] sm:$0xff]
    %v57 = vld [vmem:[#allocation6 + $0x18] sm:$0xff]
    %vm58 = vcmask 261120
    %v60 = vsel %vm58, %v52, 0
    %v63 = vsel %vm58, %v53, 0
    %65 = vmatprep.subr.mxu0 0.0
    %66 = vmatpush1.msra.mxu0 %v54
    %67 = vmatprep.subr.mxu0 0.0
    %68 = vmatpush1.msra.mxu0 %v55
    %69 = vmatprep.subr.mxu0 0.0
    %70 = vmatpush1.msra.mxu0 %v56
    %71 = vmatprep.subr.mxu0 0.0
    %72 = vmatpush1.msra.mxu0 %v57
    %73 = vmatprep.subr.mxu0 0.0
    %74 = vmatpush1.msra.mxu0 0.0
    %75 = vmatprep.subr.mxu0 0.0
    %76 = vmatpush1.msra.mxu0 0.0
    %77 = vmatprep.subr.mxu0 0.0
    %78 = vmatpush1.msra.mxu0 0.0
    %79 = vmatprep.subr.mxu0 0.0
    %80 = vmatpush1.msra.mxu0 0.0
    %81 = vmatprep.subr.mxu0 0.0
    %82 = vmatpush1.msra.mxu0 0.0
    %83 = vmatprep.subr.mxu0 0.0
    %84 = vmatpush1.msra.mxu0 0.0
    %85 = vmatprep.subr.mxu0 0.0
    %86 = vmatpush1.msra.mxu0 0.0
    %87 = vmatprep.subr.mxu0 0.0
    %88 = vmatpush1.msra.mxu0 0.0
    %89 = vmatprep.subr.mxu0 0.0
    %90 = vmatpush1.msra.mxu0 0.0
    %91 = vmatprep.subr.mxu0 0.0
    %92 = vmatpush1.msra.mxu0 0.0
    %93 = vmatprep.subr.mxu0 0.0
    %94 = vmatpush1.msra.mxu0 0.0
    %95 = vmatprep.subr.mxu0 0.0
    %96 = vmatpush1.msra.mxu0 0.0
    %97 = vmatprep.subr.mxu0 0.0
    %98 = vmatpush1.msra.mxu0 0.0
    %99 = vmatprep.subr.mxu0 0.0
    %100 = vmatpush1.msra.mxu0 0.0
    %101 = vmatprep.subr.mxu0 0.0
    %102 = vmatpush1.msra.mxu0 0.0
    %103 = vmatprep.subr.mxu0 0.0
    %104 = vmatpush1.msra.mxu0 0.0
    %105 = vmatprep.subr.mxu0 0.0
    %106 = vmatpush1.msra.mxu0 0.0
    %107 = vmatprep.subr.mxu0 0.0
    %108 = vmatpush1.msra.mxu0 0.0
    %109 = vmatprep.subr.mxu0 0.0
    %110 = vmatpush1.msra.mxu0 0.0
    %111 = vmatprep.subr.mxu0 0.0
    %112 = vmatpush1.msra.mxu0 0.0
    %113 = vmatprep.subr.mxu0 0.0
    %114 = vmatpush1.msra.mxu0 0.0
    %115 = vmatprep.subr.mxu0 0.0
    %116 = vmatpush1.msra.mxu0 0.0
    %117 = vmatprep.subr.mxu0 0.0
    %118 = vmatpush1.msra.mxu0 0.0
    %119 = vmatprep.subr.mxu0 0.0
    %120 = vmatpush1.msra.mxu0 0.0
    %121 = vmatprep.subr.mxu0 0.0
    %122 = vmatpush1.msra.mxu0 0.0
    %123 = vmatprep.subr.mxu0 0.0
    %124 = vmatpush1.msra.mxu0 0.0
    %125 = vmatprep.subr.mxu0 0.0
    %126 = vmatpush1.msra.mxu0 0.0
    %127 = vmatprep.subr.mxu0 0.0
    %128 = vmatpush1.msra.mxu0 0.0
    %129 = vmatprep.mubr.f32.mxu0 0.0
    %130 = vmatmul.mubr.f32.gmra.mrb[0].mxu0 %v60
    %v131 = vpop.f32.mrb[0].mxu0
    %v132 = vadd.f32 0.0, %v131
    %v133 = vpop.f32.mrb[0].mxu0
    %134 = vmatprep.mubr.f32.mxu0 0.0
    %135 = vmatmul.mubr.f32.gmra.mrb[0].mxu0 %v63
    %v136 = vpop.f32.mrb[0].mxu0
    %v137 = vadd.f32 0.0, %v136
    %v138 = vpop.f32.mrb[0].mxu0
    %139 = vdwg.mxu0
    %v140 = vadd.f32 %v50, %v132
    %v141 = vadd.f32 %v51, %v137
    %vm142 = vcmask 785408
    %143 = vst.msk [vmem:[#allocation2] sm:$0xff] %vm142, %v140
    %144 = vst.msk [vmem:[#allocation2 + $0x8] sm:$0xff] %vm142, %v141
    // Predicated region
    $region26: #{tpu_custom_call.1} parent=1 // pred_check
      %p145 = pneg %p43
    $region27: #{tpu_custom_call.1} parent=1 // pred_check_branch
      %147 = sbr.rel (%p145) target = $region29
    $region28: #{tpu_custom_call.1} parent=1 // pred_region
      %v148 = vld [vmem:[#allocation2] sm:$0xff]
      %v149 = vld [vmem:[#allocation2 + $0x8] sm:$0xff]
      %v150 = vld [vmem:[%s2] sm:$0x1]
      %v152 = vlaneseq
      %v153 = vshrl.u32 %v152, 7
      %v154 = vsub.s32 0, %v153
      %v155 = vrot.slane %v150, %v154
      %v157 = vadd.f32 %v148, %v155
      %v158 = vadd.f32 %v149, %v155
      %159 = vst.msk [vmem:[#allocation8] sm:$0xff] %vm142, %v157
      %160 = vst.msk [vmem:[#allocation8 + $0x8] sm:$0xff] %vm142, %v158
    $region29: #{tpu_custom_call.1} parent=1 // pred_fallthru
      _
    // Predicated region
    $region30: #{tpu_custom_call.1} parent=1 // pred_check
      _
    $region31: #{tpu_custom_call.1} parent=1 // pred_check_branch
      %162 = sbr.rel (0) target = $region33
    $region32: #{tpu_custom_call.1} parent=1 // pred_region
      %s164 = ssub.s32 256, 256
      %165 = vsyncadd [#allocation5], %s164
      %s166 = sshll.u32 [#allocation8], 4
      %s167 = int_to_ptr.vmem [resolvable:$true] %s166
      %172 = dma.vmem_to_hbm [thread:$0]  %s167, 256, %s3, [#allocation5], 128, 128, 8
    $region33: #{tpu_custom_call.1} parent=1 // pred_fallthru
      _
    // Predicated region
    $region34: #{tpu_custom_call.1} parent=1 // pred_check
      _
    $region35: #{tpu_custom_call.1} parent=1 // pred_check_branch
      %174 = sbr.rel (0) target = $region37
    $region36: #{tpu_custom_call.1} parent=1 // pred_region
      %175 = dma.done [#allocation5], 256
    $region37: #{tpu_custom_call.1} parent=1 // pred_fallthru
      _
    %176 = vsyncpa [#allocation4], 1
    %177 = vsyncpa [#allocation7], 1
    %178 = vsyncpa [#allocation5], 1

</llo_original>
